<compile_context>
chip_gen: v5e
topology: v5e:2x2
jax: 0.10.0
libtpu: 0.0.40
codegen_flags: <defaults>
</compile_context>

<pallas_src>
import jax
import jax.numpy as jnp
from jax.experimental import pallas as pl
from jax.experimental.pallas import tpu as pltpu


def _round_up(n, m):
    return ((n + m - 1) // m) * m


# ---------------------------------------------------------------------------
# Kernel
# ---------------------------------------------------------------------------
def _mlp_kernel(x_ref,
                w1_ref, b1_ref,
                w2_ref, b2_ref,
                w3_ref, b3_ref,
                w4_ref, b4_ref,
                w5_ref, b5_ref,
                o_ref):
    # x tile stays f32; cast to bf16 only right at each MXU feed so no extra
    # full-tile copy is materialized.
    h = x_ref[...]

    def lin_relu(h, w_ref, b_ref):
        # bf16 x bf16 -> f32 accumulate on the MXU; f32 bias + ReLU on the VPU.
        z = jnp.dot(h.astype(jnp.bfloat16), w_ref[...],
                    preferred_element_type=jnp.float32)
        return jnp.maximum(z + b_ref[...], 0.0)
        # Dropout(p=0.5) is identity in eval mode.

    h = lin_relu(h, w1_ref, b1_ref)
    h = lin_relu(h, w2_ref, b2_ref)
    h = lin_relu(h, w3_ref, b3_ref)
    h = lin_relu(h, w4_ref, b4_ref)

    # Final Linear(20, 1): a single output lane wastes the MXU, so do it as a
    # VPU multiply + cross-lane (XLU) reduction instead.
    o_ref[...] = (jnp.sum(h * w5_ref[...], axis=-1, keepdims=True)
                  + b5_ref[...])


# ---------------------------------------------------------------------------
# Wrapper
# ---------------------------------------------------------------------------
def mlp_first_forward(x, fused, *, tile_b=2048):
    """x: (B, 18) float32. fused: dict from fuse_params()."""
    x = x.reshape(x.shape[0], -1)          # matches x.view(x.size(0), -1)
    B, F = x.shape

    # Tile the batch; TILE_B must be a multiple of 8 (sublane granularity).
    tile_b = min(tile_b, _round_up(B, 8))
    b_pad = _round_up(B, tile_b)
    if b_pad != B:
        x = jnp.pad(x, ((0, b_pad - B), (0, 0)))

    weights = (
        fused["w1"], fused["b1"],
        fused["w2"], fused["b2"],
        fused["w3"], fused["b3"],
        fused["w4"], fused["b4"],
        fused["w5"], fused["b5"],
    )

    def const_spec(a):
        # Full-array block with a constant index_map -> stays VMEM-resident,
        # no per-step re-DMA.
        return pl.BlockSpec(a.shape, lambda i: (0, 0))

    out = pl.pallas_call(
        _mlp_kernel,
        out_shape=jax.ShapeDtypeStruct((b_pad, 1), jnp.float32),
        grid=(b_pad // tile_b,),
        in_specs=[pl.BlockSpec((tile_b, F), lambda i: (i, 0))]
                 + [const_spec(a) for a in weights],
        out_specs=pl.BlockSpec((tile_b, 1), lambda i: (i, 0)),
        compiler_params=pltpu.CompilerParams(
            dimension_semantics=("parallel",)),
    )(x, *weights)

    return out[:B]


# ---------------------------------------------------------------------------
# Parameters (raw, PyTorch-equivalent) and host-side fusion
# ---------------------------------------------------------------------------
_EPS = 1e-5


def init_params(key):
    """Raw parameters matching MLP_first's modules.

    Linear weights are stored transposed as (in, out); BatchNorm1d keeps its
    own gamma/beta and running mean/var (eval-mode statistics).
    """
    dims = [(18, 256), (256, 100), (100, 100), (100, 20), (20, 1)]
    params = {}
    keys = jax.random.split(key, 64)
    ki = 0

    def nxt():
        nonlocal ki
        k = keys[ki]
        ki += 1
        return k

    for idx, (fan_in, fan_out) in enumerate(dims, start=1):
        bound = 1.0 / jnp.sqrt(jnp.float32(fan_in))
        # PyTorch nn.Linear default init: U(-1/sqrt(fan_in), 1/sqrt(fan_in))
        params[f"w{idx}"] = jax.random.uniform(
            nxt(), (fan_in, fan_out), jnp.float32, -bound, bound)
        params[f"b{idx}"] = jax.random.uniform(
            nxt(), (1, fan_out), jnp.float32, -bound, bound)
        if idx <= 4:  # layers 1..4 have BatchNorm1d
            params[f"gamma{idx}"] = 1.0 + 0.1 * jax.random.normal(
                nxt(), (1, fan_out), jnp.float32)
            params[f"beta{idx}"] = 0.1 * jax.random.normal(
                nxt(), (1, fan_out), jnp.float32)
            params[f"mean{idx}"] = 0.1 * jax.random.normal(
                nxt(), (1, fan_out), jnp.float32)
            params[f"var{idx}"] = jax.random.uniform(
                nxt(), (1, fan_out), jnp.float32, 0.5, 1.5)
    return params


def fuse_params(params, eps=_EPS):
    """Fold eval-mode BatchNorm into the Linear layers, cast matmul weights to
    bf16, and re-lay the final (20, 1) weight as a (1, 20) row for the VPU."""
    fused = {}
    for idx in range(1, 5):
        scale = params[f"gamma{idx}"] / jnp.sqrt(params[f"var{idx}"] + eps)
        shift = params[f"beta{idx}"] - params[f"mean{idx}"] * scale
        fused[f"w{idx}"] = (params[f"w{idx}"] * scale).astype(jnp.bfloat16)
        fused[f"b{idx}"] = (params[f"b{idx}"] * scale + shift).astype(jnp.float32)
    fused["w5"] = params["w5"].T.astype(jnp.float32)   # (1, 20)
    fused["b5"] = params["b5"].astype(jnp.float32)     # (1, 1)
    return fused


# ---------------------------------------------------------------------------
# References
# ---------------------------------------------------------------------------
def reference_forward_f32(x, params, eps=_EPS):
    """Pure-JAX f32 reference with explicit (unfused) BatchNorm."""
    h = x.reshape(x.shape[0], -1)
    for idx in range(1, 5):
        z = h @ params[f"w{idx}"] + params[f"b{idx}"]
        z = ((z - params[f"mean{idx}"])
             / jnp.sqrt(params[f"var{idx}"] + eps)) * params[f"gamma{idx}"] \
            + params[f"beta{idx}"]
        h = jnp.maximum(z, 0.0)
    return h @ params["w5"] + params["b5"]


def reference_forward_kernel_math(x, fused):
    """Pure-JAX mirror of the exact kernel math (bf16 dots, folded BN)."""
    h = x.reshape(x.shape[0], -1)
    for idx in range(1, 5):
        z = jnp.dot(h.astype(jnp.bfloat16), fused[f"w{idx}"],
                    preferred_element_type=jnp.float32) + fused[f"b{idx}"]
        h = jnp.maximum(z, 0.0)
    return jnp.sum(h * fused["w5"], axis=-1, keepdims=True) + fused["b5"]


# ---------------------------------------------------------------------------
# Test
# ---------------------------------------------------------------------------
if __name__ == "__main__":
    key = jax.random.PRNGKey(0)
    k_x, k_p = jax.random.split(key)

    B = 8
    x = jax.random.normal(k_x, (B, 18), jnp.float32)
    params = init_params(k_p)
    fused = fuse_params(params)

    out = mlp_first_forward(x, fused)
    out = jax.block_until_ready(out)
    assert out.shape == (B, 1), out.shape

    # Tight check against a reference that mirrors the kernel math exactly.
    ref_mirror = reference_forward_kernel_math(x, fused)
    err_mirror = jnp.max(jnp.abs(out - ref_mirror))
    assert jnp.allclose(out, ref_mirror, atol=2e-3, rtol=2e-3), (
        f"mirror max abs err = {err_mirror}")

    # Loose check against the f32, unfused-BN reference (bf16 weights lose a
    # little precision, so the tolerance is relaxed).
    ref_f32 = reference_forward_f32(x, params)
    err_f32 = jnp.max(jnp.abs(out - ref_f32))
    assert jnp.allclose(out, ref_f32, atol=0.25, rtol=0.05), (
        f"f32 max abs err = {err_f32}")

    print("KERNEL_OK")
</pallas_src>

<mosaic_0001>
module attributes {stable_mosaic.version = 11 : i64} {
  func.func @_mlp_kernel(%arg0: i32, %arg1: memref<8x18xf32, #tpu.memory_space<vmem>>, %arg2: memref<18x256xbf16, #tpu.memory_space<vmem>>, %arg3: memref<1x256xf32, #tpu.memory_space<vmem>>, %arg4: memref<256x100xbf16, #tpu.memory_space<vmem>>, %arg5: memref<1x100xf32, #tpu.memory_space<vmem>>, %arg6: memref<100x100xbf16, #tpu.memory_space<vmem>>, %arg7: memref<1x100xf32, #tpu.memory_space<vmem>>, %arg8: memref<100x20xbf16, #tpu.memory_space<vmem>>, %arg9: memref<1x20xf32, #tpu.memory_space<vmem>>, %arg10: memref<1x20xf32, #tpu.memory_space<vmem>>, %arg11: memref<1x1xf32, #tpu.memory_space<vmem>>, %arg12: memref<8x1xf32, #tpu.memory_space<vmem>>) attributes {dimension_semantics = [#tpu.dimension_semantics<parallel>], iteration_bounds = array<i64: 1>, scalar_prefetch = 0 : i64, scratch_operands = 0 : i64, tpu.core_type = #tpu.core_type<tc>, window_params = [{transform_indices = @transform_0, window_bounds = array<i64: 8, 18>}, {pipeline_mode = #tpu.pipeline_mode<synchronous>, transform_indices = @transform_1, window_bounds = array<i64: 18, 256>}, {pipeline_mode = #tpu.pipeline_mode<synchronous>, transform_indices = @transform_2, window_bounds = array<i64: 1, 256>}, {pipeline_mode = #tpu.pipeline_mode<synchronous>, transform_indices = @transform_3, window_bounds = array<i64: 256, 100>}, {pipeline_mode = #tpu.pipeline_mode<synchronous>, transform_indices = @transform_4, window_bounds = array<i64: 1, 100>}, {pipeline_mode = #tpu.pipeline_mode<synchronous>, transform_indices = @transform_5, window_bounds = array<i64: 100, 100>}, {pipeline_mode = #tpu.pipeline_mode<synchronous>, transform_indices = @transform_6, window_bounds = array<i64: 1, 100>}, {pipeline_mode = #tpu.pipeline_mode<synchronous>, transform_indices = @transform_7, window_bounds = array<i64: 100, 20>}, {pipeline_mode = #tpu.pipeline_mode<synchronous>, transform_indices = @transform_8, window_bounds = array<i64: 1, 20>}, {pipeline_mode = #tpu.pipeline_mode<synchronous>, transform_indices = @transform_9, window_bounds = array<i64: 1, 20>}, {pipeline_mode = #tpu.pipeline_mode<synchronous>, transform_indices = @transform_10, window_bounds = array<i64: 1, 1>}, {transform_indices = @transform_11, window_bounds = array<i64: 8, 1>}]} {
    %c0 = arith.constant 0 : index
    %c0_0 = arith.constant 0 : index
    %0 = vector.load %arg1[%c0, %c0_0] : memref<8x18xf32, #tpu.memory_space<vmem>>, vector<8x18xf32>
    %1 = arith.truncf %0 : vector<8x18xf32> to vector<8x18xbf16>
    %c0_1 = arith.constant 0 : index
    %c0_2 = arith.constant 0 : index
    %2 = vector.load %arg2[%c0_1, %c0_2] : memref<18x256xbf16, #tpu.memory_space<vmem>>, vector<18x256xbf16>
    %cst = arith.constant dense<0.000000e+00> : vector<8x256xf32>
    %3 = tpu.matmul %1, %2, %cst {dimension_numbers = #tpu.dot_dimension_numbers<[1], [0], [0], [1], [0, 0, 1, 1], [], []>} : vector<8x18xbf16>, vector<18x256xbf16>, vector<8x256xf32> -> vector<8x256xf32>
    %c0_3 = arith.constant 0 : index
    %c0_4 = arith.constant 0 : index
    %4 = vector.load %arg3[%c0_3, %c0_4] : memref<1x256xf32, #tpu.memory_space<vmem>>, vector<1x256xf32>
    %5 = vector.broadcast %4 : vector<1x256xf32> to vector<8x256xf32>
    %6 = arith.addf %3, %5 : vector<8x256xf32>
    %cst_5 = arith.constant 0.000000e+00 : f32
    %7 = vector.broadcast %cst_5 : f32 to vector<8x256xf32>
    %8 = arith.maximumf %6, %7 : vector<8x256xf32>
    %9 = arith.truncf %8 : vector<8x256xf32> to vector<8x256xbf16>
    %c0_6 = arith.constant 0 : index
    %c0_7 = arith.constant 0 : index
    %10 = vector.load %arg4[%c0_6, %c0_7] : memref<256x100xbf16, #tpu.memory_space<vmem>>, vector<256x100xbf16>
    %cst_8 = arith.constant dense<0.000000e+00> : vector<8x100xf32>
    %11 = tpu.matmul %9, %10, %cst_8 {dimension_numbers = #tpu.dot_dimension_numbers<[1], [0], [0], [1], [0, 0, 1, 1], [], []>} : vector<8x256xbf16>, vector<256x100xbf16>, vector<8x100xf32> -> vector<8x100xf32>
    %c0_9 = arith.constant 0 : index
    %c0_10 = arith.constant 0 : index
    %12 = vector.load %arg5[%c0_9, %c0_10] : memref<1x100xf32, #tpu.memory_space<vmem>>, vector<1x100xf32>
    %13 = vector.broadcast %12 : vector<1x100xf32> to vector<8x100xf32>
    %14 = arith.addf %11, %13 : vector<8x100xf32>
    %cst_11 = arith.constant 0.000000e+00 : f32
    %15 = vector.broadcast %cst_11 : f32 to vector<8x100xf32>
    %16 = arith.maximumf %14, %15 : vector<8x100xf32>
    %17 = arith.truncf %16 : vector<8x100xf32> to vector<8x100xbf16>
    %c0_12 = arith.constant 0 : index
    %c0_13 = arith.constant 0 : index
    %18 = vector.load %arg6[%c0_12, %c0_13] : memref<100x100xbf16, #tpu.memory_space<vmem>>, vector<100x100xbf16>
    %cst_14 = arith.constant dense<0.000000e+00> : vector<8x100xf32>
    %19 = tpu.matmul %17, %18, %cst_14 {dimension_numbers = #tpu.dot_dimension_numbers<[1], [0], [0], [1], [0, 0, 1, 1], [], []>} : vector<8x100xbf16>, vector<100x100xbf16>, vector<8x100xf32> -> vector<8x100xf32>
    %c0_15 = arith.constant 0 : index
    %c0_16 = arith.constant 0 : index
    %20 = vector.load %arg7[%c0_15, %c0_16] : memref<1x100xf32, #tpu.memory_space<vmem>>, vector<1x100xf32>
    %21 = vector.broadcast %20 : vector<1x100xf32> to vector<8x100xf32>
    %22 = arith.addf %19, %21 : vector<8x100xf32>
    %cst_17 = arith.constant 0.000000e+00 : f32
    %23 = vector.broadcast %cst_17 : f32 to vector<8x100xf32>
    %24 = arith.maximumf %22, %23 : vector<8x100xf32>
    %25 = arith.truncf %24 : vector<8x100xf32> to vector<8x100xbf16>
    %c0_18 = arith.constant 0 : index
    %c0_19 = arith.constant 0 : index
    %26 = vector.load %arg8[%c0_18, %c0_19] : memref<100x20xbf16, #tpu.memory_space<vmem>>, vector<100x20xbf16>
    %cst_20 = arith.constant dense<0.000000e+00> : vector<8x20xf32>
    %27 = tpu.matmul %25, %26, %cst_20 {dimension_numbers = #tpu.dot_dimension_numbers<[1], [0], [0], [1], [0, 0, 1, 1], [], []>} : vector<8x100xbf16>, vector<100x20xbf16>, vector<8x20xf32> -> vector<8x20xf32>
    %c0_21 = arith.constant 0 : index
    %c0_22 = arith.constant 0 : index
    %28 = vector.load %arg9[%c0_21, %c0_22] : memref<1x20xf32, #tpu.memory_space<vmem>>, vector<1x20xf32>
    %29 = vector.broadcast %28 : vector<1x20xf32> to vector<8x20xf32>
    %30 = arith.addf %27, %29 : vector<8x20xf32>
    %cst_23 = arith.constant 0.000000e+00 : f32
    %31 = vector.broadcast %cst_23 : f32 to vector<8x20xf32>
    %32 = arith.maximumf %30, %31 : vector<8x20xf32>
    %c0_24 = arith.constant 0 : index
    %c0_25 = arith.constant 0 : index
    %33 = vector.load %arg10[%c0_24, %c0_25] : memref<1x20xf32, #tpu.memory_space<vmem>>, vector<1x20xf32>
    %34 = vector.broadcast %33 : vector<1x20xf32> to vector<8x20xf32>
    %35 = arith.mulf %32, %34 : vector<8x20xf32>
    %cst_26 = arith.constant dense<0.000000e+00> : vector<8xf32>
    %36 = vector.multi_reduction <add>, %35, %cst_26 [1] : vector<8x20xf32> to vector<8xf32>
    %37 = vector.shape_cast %36 : vector<8xf32> to vector<8x1xf32>
    %c0_27 = arith.constant 0 : index
    %c0_28 = arith.constant 0 : index
    %38 = vector.load %arg11[%c0_27, %c0_28] : memref<1x1xf32, #tpu.memory_space<vmem>>, vector<1x1xf32>
    %39 = vector.broadcast %38 : vector<1x1xf32> to vector<8x1xf32>
    %40 = arith.addf %37, %39 : vector<8x1xf32>
    %c0_29 = arith.constant 0 : index
    %c0_30 = arith.constant 0 : index
    %41 = vector.load %arg12[%c0_29, %c0_30] : memref<8x1xf32, #tpu.memory_space<vmem>>, vector<8x1xf32>
    tpu.vector_store %arg12[%c0_29, %c0_30], %40 {strides = array<i32>} : memref<8x1xf32, #tpu.memory_space<vmem>>, vector<8x1xf32>,
    return
  }
  func.func @transform_0(%arg0: i32) -> (i32, i32) {
    %c0_i32 = arith.constant 0 : i32
    %c0_i32_0 = arith.constant 0 : i32
    return %arg0, %c0_i32 : i32, i32
  }
  func.func @transform_1(%arg0: i32) -> (i32, i32) {
    %c0_i32 = arith.constant 0 : i32
    %c0_i32_0 = arith.constant 0 : i32
    %c0_i32_1 = arith.constant 0 : i32
    return %c0_i32, %c0_i32_0 : i32, i32
  }
  func.func @transform_2(%arg0: i32) -> (i32, i32) {
    %c0_i32 = arith.constant 0 : i32
    %c0_i32_0 = arith.constant 0 : i32
    %c0_i32_1 = arith.constant 0 : i32
    return %c0_i32, %c0_i32_0 : i32, i32
  }
  func.func @transform_3(%arg0: i32) -> (i32, i32) {
    %c0_i32 = arith.constant 0 : i32
    %c0_i32_0 = arith.constant 0 : i32
    %c0_i32_1 = arith.constant 0 : i32
    return %c0_i32, %c0_i32_0 : i32, i32
  }
  func.func @transform_4(%arg0: i32) -> (i32, i32) {
    %c0_i32 = arith.constant 0 : i32
    %c0_i32_0 = arith.constant 0 : i32
    %c0_i32_1 = arith.constant 0 : i32
    return %c0_i32, %c0_i32_0 : i32, i32
  }
  func.func @transform_5(%arg0: i32) -> (i32, i32) {
    %c0_i32 = arith.constant 0 : i32
    %c0_i32_0 = arith.constant 0 : i32
    %c0_i32_1 = arith.constant 0 : i32
    return %c0_i32, %c0_i32_0 : i32, i32
  }
  func.func @transform_6(%arg0: i32) -> (i32, i32) {
    %c0_i32 = arith.constant 0 : i32
    %c0_i32_0 = arith.constant 0 : i32
    %c0_i32_1 = arith.constant 0 : i32
    return %c0_i32, %c0_i32_0 : i32, i32
  }
  func.func @transform_7(%arg0: i32) -> (i32, i32) {
    %c0_i32 = arith.constant 0 : i32
    %c0_i32_0 = arith.constant 0 : i32
    %c0_i32_1 = arith.constant 0 : i32
    return %c0_i32, %c0_i32_0 : i32, i32
  }
  func.func @transform_8(%arg0: i32) -> (i32, i32) {
    %c0_i32 = arith.constant 0 : i32
    %c0_i32_0 = arith.constant 0 : i32
    %c0_i32_1 = arith.constant 0 : i32
    return %c0_i32, %c0_i32_0 : i32, i32
  }
  func.func @transform_9(%arg0: i32) -> (i32, i32) {
    %c0_i32 = arith.constant 0 : i32
    %c0_i32_0 = arith.constant 0 : i32
    %c0_i32_1 = arith.constant 0 : i32
    return %c0_i32, %c0_i32_0 : i32, i32
  }
  func.func @transform_10(%arg0: i32) -> (i32, i32) {
    %c0_i32 = arith.constant 0 : i32
    %c0_i32_0 = arith.constant 0 : i32
    %c0_i32_1 = arith.constant 0 : i32
    return %c0_i32, %c0_i32_0 : i32, i32
  }
  func.func @transform_11(%arg0: i32) -> (i32, i32) {
    %c0_i32 = arith.constant 0 : i32
    %c0_i32_0 = arith.constant 0 : i32
    return %arg0, %c0_i32 : i32, i32
  }
}

</mosaic_0001>

<llo_original>
// kernel: tpu_custom_call.1
$region0: #{tpu_custom_call.1}
  #allocation0 [shape = 'u32[]', space=smem, size = 0x4, offset = 0x4, fixed_abs, tag = 'smem constant byte address 0x4 - core index']
  #allocation1 [shape = 'u32[72,128]{1,0:T(1,128)}', space=vmem, size = 0x9000, scoped, tag = 'internal scratch']
  #allocation2 [shape = 'f32[1,1]{1,0:T(1,128)S(1)}', space=vmem, size = 0x200, scoped, tag = 'scoped memory for tpu_custom_call.1']
  %s0 = inlined_call_operand.vmem [shape: f32[8,18], index: 0, kind: input, shape index: {}]
  %s1 = inlined_call_operand.vmem [shape: bf16[18,256], index: 1, kind: input, shape index: {}]
  %s2 = inlined_call_operand.vmem [shape: f32[1,256], index: 2, kind: input, shape index: {}]
  %s3 = inlined_call_operand.vmem [shape: bf16[256,100], index: 3, kind: input, shape index: {}]
  %s4 = inlined_call_operand.vmem [shape: f32[1,100], index: 4, kind: input, shape index: {}]
  %s5 = inlined_call_operand.vmem [shape: bf16[100,100], index: 5, kind: input, shape index: {}]
  %s6 = inlined_call_operand.vmem [shape: f32[1,100], index: 6, kind: input, shape index: {}]
  %s7 = inlined_call_operand.vmem [shape: bf16[100,20], index: 7, kind: input, shape index: {}]
  %s8 = inlined_call_operand.vmem [shape: f32[1,20], index: 8, kind: input, shape index: {}]
  %s9 = inlined_call_operand.vmem [shape: f32[1,20], index: 9, kind: input, shape index: {}]
  %s10 = inlined_call_operand.<no memory space> [shape: f32[1,1], index: 10, kind: input, shape index: {}]
  %s11 = inlined_call_operand.vmem [shape: f32[8,1], index: 11, kind: output, shape index: {}]
  %s12 = sld [smem:[#allocation0]]
  $region54: #{tpu_custom_call.1} parent=0
    _
  %s14 = ssub.s32 1, %s12
  %s15 = scalar_select 0, %s14, %s12
  %v16 = vstv %s10
  %17 = vst [vmem:[#allocation2] sm:$0x1] %v16
  // Predicated region
  $region2: #{tpu_custom_call.1} parent=0 // pred_check
    _
  $region3: #{tpu_custom_call.1} parent=0 // pred_check_branch
    %19 = sbr.rel (0) target = $region5
  $region4: #{tpu_custom_call.1} parent=0 // pred_region
    _
  $region5: #{tpu_custom_call.1} parent=0 // pred_fallthru
    _
  // Predicated region
  $region6: #{tpu_custom_call.1} parent=0 // pred_check
    _
  $region7: #{tpu_custom_call.1} parent=0 // pred_check_branch
    %21 = sbr.rel (0) target = $region9
  $region8: #{tpu_custom_call.1} parent=0 // pred_region
    _
  $region9: #{tpu_custom_call.1} parent=0 // pred_fallthru
    _
  // Predicated region
  $region10: #{tpu_custom_call.1} parent=0 // pred_check
    _
  $region11: #{tpu_custom_call.1} parent=0 // pred_check_branch
    %23 = sbr.rel (0) target = $region13
  $region12: #{tpu_custom_call.1} parent=0 // pred_region
    _
  $region13: #{tpu_custom_call.1} parent=0 // pred_fallthru
    _
  // Predicated region
  $region14: #{tpu_custom_call.1} parent=0 // pred_check
    _
  $region15: #{tpu_custom_call.1} parent=0 // pred_check_branch
    %25 = sbr.rel (0) target = $region17
  $region16: #{tpu_custom_call.1} parent=0 // pred_region
    _
  $region17: #{tpu_custom_call.1} parent=0 // pred_fallthru
    _
  // Predicated region
  $region18: #{tpu_custom_call.1} parent=0 // pred_check
    _
  $region19: #{tpu_custom_call.1} parent=0 // pred_check_branch
    %27 = sbr.rel (0) target = $region21
  $region20: #{tpu_custom_call.1} parent=0 // pred_region
    _
  $region21: #{tpu_custom_call.1} parent=0 // pred_fallthru
    _
  // Predicated region
  $region22: #{tpu_custom_call.1} parent=0 // pred_check
    _
  $region23: #{tpu_custom_call.1} parent=0 // pred_check_branch
    %29 = sbr.rel (0) target = $region25
  $region24: #{tpu_custom_call.1} parent=0 // pred_region
    _
  $region25: #{tpu_custom_call.1} parent=0 // pred_fallthru
    _
  // Predicated region
  $region26: #{tpu_custom_call.1} parent=0 // pred_check
    _
  $region27: #{tpu_custom_call.1} parent=0 // pred_check_branch
    %31 = sbr.rel (0) target = $region29
  $region28: #{tpu_custom_call.1} parent=0 // pred_region
    _
  $region29: #{tpu_custom_call.1} parent=0 // pred_fallthru
    _
  // Predicated region
  $region30: #{tpu_custom_call.1} parent=0 // pred_check
    _
  $region31: #{tpu_custom_call.1} parent=0 // pred_check_branch
    %33 = sbr.rel (0) target = $region33
  $region32: #{tpu_custom_call.1} parent=0 // pred_region
    _
  $region33: #{tpu_custom_call.1} parent=0 // pred_fallthru
    _
  // Predicated region
  $region34: #{tpu_custom_call.1} parent=0 // pred_check
    _
  $region35: #{tpu_custom_call.1} parent=0 // pred_check_branch
    %35 = sbr.rel (0) target = $region37
  $region36: #{tpu_custom_call.1} parent=0 // pred_region
    _
  $region37: #{tpu_custom_call.1} parent=0 // pred_fallthru
    _
  // Predicated region
  $region38: #{tpu_custom_call.1} parent=0 // pred_check
    _
  $region39: #{tpu_custom_call.1} parent=0 // pred_check_branch
    %37 = sbr.rel (0) target = $region41
  $region40: #{tpu_custom_call.1} parent=0 // pred_region
    _
  $region41: #{tpu_custom_call.1} parent=0 // pred_fallthru
    _
  // Predicated region
  $region42: #{tpu_custom_call.1} parent=0 // pred_check
    _
  $region43: #{tpu_custom_call.1} parent=0 // pred_check_branch
    %39 = sbr.rel (0) target = $region45
  $region44: #{tpu_custom_call.1} parent=0 // pred_region
    _
  $region45: #{tpu_custom_call.1} parent=0 // pred_fallthru
    _
  %v41 = vld [vmem:[%s0] sm:$0xff]
  %v42 = vpack.c.bf16 %v41, %v41
  %v43 = vld [vmem:[%s1] sm:$0xff]
  %v44 = vld [vmem:[%s1 + $0x8] sm:$0xff]
  %v45 = vld [vmem:[%s1 + $0x10] sm:$0x11]
  %v46 = vld [vmem:[%s2] sm:$0x3]
  %v48 = vperm.slane %v46, 0
  %v49 = vperm.slane %v46, 1
  %v55 = vunpack.c.l.b16 %v43
  %v56 = vunpack.c.h.b16 %v43
  %v57 = vunpack.c.l.b16 %v44
  %v58 = vunpack.c.h.b16 %v44
  %v59 = vunpack.c.l.b16 %v45
  %v60 = vunpack.c.h.b16 %v45
  %v61 = vpack.c.b16 %v57, %v55
  %v62 = vpack.c.b16 %v58, %v56
  %v63 = vpack.c.b16 %v59, %v59
  %v64 = vpack.c.b16 %v60, %v60
  %vm67 = vcmask 146432
  %v69 = vsel %vm67, %v42, 0
  %vm71 = vcmask 1040384
  %v73 = vsel %vm71, %v63, 0
  %v76 = vsel %vm71, %v64, 0
  %78 = vmatpush.bf16.msra.mxu0 0
  %79 = vmatpush.bf16.msra.mxu0 0
  %80 = vmatpush.bf16.msra.mxu0 0
  %81 = vmatpush.bf16.msra.mxu0 0
  %82 = vmatpush.bf16.msra.mxu0 0
  %83 = vmatpush.bf16.msra.mxu0 0
  %84 = vmatpush.bf16.msra.mxu0 %v73
  %85 = vmatpush.bf16.msra.mxu0 %v61
  %86 = vmatmul.bf16.gmra.mxu0 %v69
  %v87 = vpop.f32.mrf.mxu0
  %v88 = vadd.f32 %v48, %v87
  %v89 = vpop.f32.mrf.mxu0
  %90 = vdwg.mxu0
  %91 = vmatpush.bf16.msra.mxu0 0
  %92 = vmatpush.bf16.msra.mxu0 0
  %93 = vmatpush.bf16.msra.mxu0 0
  %94 = vmatpush.bf16.msra.mxu0 0
  %95 = vmatpush.bf16.msra.mxu0 0
  %96 = vmatpush.bf16.msra.mxu0 0
  %97 = vmatpush.bf16.msra.mxu0 %v76
  %98 = vmatpush.bf16.msra.mxu0 %v62
  %99 = vmatmul.bf16.gmra.mxu0 %v69
  %v100 = vpop.f32.mrf.mxu0
  %v101 = vadd.f32 %v49, %v100
  %v102 = vpop.f32.mrf.mxu0
  %103 = vdwg.mxu0
  %v104 = vmax.f32 %v88, 0.0
  %v105 = vmax.f32 %v101, 0.0
  %v106 = vpack.c.bf16 %v104, %v104
  %v107 = vpack.c.bf16 %v105, %v105
  %v108 = vld [vmem:[%s3] sm:$0xf]
  %v109 = vld [vmem:[%s3 + $0x4] sm:$0xf]
  %v110 = vld [vmem:[%s3 + $0x8] sm:$0xf]
  %v111 = vld [vmem:[%s3 + $0xc] sm:$0xf]
  %v112 = vld [vmem:[%s3 + $0x10] sm:$0xf]
  %v113 = vld [vmem:[%s3 + $0x14] sm:$0xf]
  %v114 = vld [vmem:[%s3 + $0x18] sm:$0xf]
  %v115 = vld [vmem:[%s3 + $0x1c] sm:$0xf]
  %v116 = vld [vmem:[%s3 + $0x20] sm:$0xf]
  %v117 = vld [vmem:[%s3 + $0x24] sm:$0xf]
  %v118 = vld [vmem:[%s3 + $0x28] sm:$0xf]
  %v119 = vld [vmem:[%s3 + $0x2c] sm:$0xf]
  %v120 = vld [vmem:[%s3 + $0x30] sm:$0xf]
  %v121 = vld [vmem:[%s3 + $0x34] sm:$0xf]
  %v122 = vld [vmem:[%s3 + $0x38] sm:$0xf]
  %v123 = vld [vmem:[%s3 + $0x3c] sm:$0xf]
  %v124 = vld [vmem:[%s3 + $0x40] sm:$0xf]
  %v125 = vld [vmem:[%s3 + $0x44] sm:$0xf]
  %v126 = vld [vmem:[%s3 + $0x48] sm:$0xf]
  %v127 = vld [vmem:[%s3 + $0x4c] sm:$0xf]
  %v128 = vld [vmem:[%s3 + $0x50] sm:$0xf]
  %v129 = vld [vmem:[%s3 + $0x54] sm:$0xf]
  %v130 = vld [vmem:[%s3 + $0x58] sm:$0xf]
  %v131 = vld [vmem:[%s3 + $0x5c] sm:$0xf]
  %v132 = vld [vmem:[%s3 + $0x60] sm:$0xf]
  %v133 = vld [vmem:[%s3 + $0x64] sm:$0xf]
  %v134 = vld [vmem:[%s3 + $0x68] sm:$0xf]
  %v135 = vld [vmem:[%s3 + $0x6c] sm:$0xf]
  %v136 = vld [vmem:[%s3 + $0x70] sm:$0xf]
  %v137 = vld [vmem:[%s3 + $0x74] sm:$0xf]
  %v138 = vld [vmem:[%s3 + $0x78] sm:$0xf]
  %v139 = vld [vmem:[%s3 + $0x7c] sm:$0xf]
  %v140 = vld [vmem:[%s4] sm:$0x1]
  %v142 = vperm.slane %v140, 0
  %v176 = vunpack.c.l.b16 %v108
  %v177 = vunpack.c.l.b16 %v109
  %v178 = vunpack.c.l.b16 %v110
  %v179 = vunpack.c.l.b16 %v111
  %v180 = vunpack.c.l.b16 %v112
  %v181 = vunpack.c.l.b16 %v113
  %v182 = vunpack.c.l.b16 %v114
  %v183 = vunpack.c.l.b16 %v115
  %v184 = vunpack.c.l.b16 %v116
  %v185 = vunpack.c.l.b16 %v117
  %v186 = vunpack.c.l.b16 %v118
  %v187 = vunpack.c.l.b16 %v119
  %v188 = vunpack.c.l.b16 %v120
  %v189 = vunpack.c.l.b16 %v121
  %v190 = vunpack.c.l.b16 %v122
  %v191 = vunpack.c.l.b16 %v123
  %v192 = vunpack.c.l.b16 %v124
  %v193 = vunpack.c.l.b16 %v125
  %v194 = vunpack.c.l.b16 %v126
  %v195 = vunpack.c.l.b16 %v127
  %v196 = vunpack.c.l.b16 %v128
  %v197 = vunpack.c.l.b16 %v129
  %v198 = vunpack.c.l.b16 %v130
  %v199 = vunpack.c.l.b16 %v131
  %v200 = vunpack.c.l.b16 %v132
  %v201 = vunpack.c.l.b16 %v133
  %v202 = vunpack.c.l.b16 %v134
  %v203 = vunpack.c.l.b16 %v135
  %v204 = vunpack.c.l.b16 %v136
  %v205 = vunpack.c.l.b16 %v137
  %v206 = vunpack.c.l.b16 %v138
  %v207 = vunpack.c.l.b16 %v139
  %v208 = vpack.c.b16 %v177, %v176
  %v209 = vpack.c.b16 %v179, %v178
  %v210 = vpack.c.b16 %v181, %v180
  %v211 = vpack.c.b16 %v183, %v182
  %v212 = vpack.c.b16 %v185, %v184
  %v213 = vpack.c.b16 %v187, %v186
  %v214 = vpack.c.b16 %v189, %v188
  %v215 = vpack.c.b16 %v191, %v190
  %v216 = vpack.c.b16 %v193, %v192
  %v217 = vpack.c.b16 %v195, %v194
  %v218 = vpack.c.b16 %v197, %v196
  %v219 = vpack.c.b16 %v199, %v198
  %v220 = vpack.c.b16 %v201, %v200
  %v221 = vpack.c.b16 %v203, %v202
  %v222 = vpack.c.b16 %v205, %v204
  %v223 = vpack.c.b16 %v207, %v206
  %240 = vmatpush.bf16.msra.mxu0 %v215
  %241 = vmatpush.bf16.msra.mxu0 %v214
  %242 = vmatpush.bf16.msra.mxu0 %v213
  %243 = vmatpush.bf16.msra.mxu0 %v212
  %244 = vmatpush.bf16.msra.mxu0 %v211
  %245 = vmatpush.bf16.msra.mxu0 %v210
  %246 = vmatpush.bf16.msra.mxu0 %v209
  %247 = vmatpush.bf16.msra.mxu0 %v208
  %248 = vmatmul.bf16.gmra.mxu0 %v106
  %v249 = vpop.f32.mrf.mxu0
  %v250 = vadd.f32 %v142, %v249
  %v251 = vpop.f32.mrf.mxu0
  %252 = vdwg.mxu0
  %253 = vmatpush.bf16.msra.mxu0 %v223
  %254 = vmatpush.bf16.msra.mxu0 %v222
  %255 = vmatpush.bf16.msra.mxu0 %v221
  %256 = vmatpush.bf16.msra.mxu0 %v220
  %257 = vmatpush.bf16.msra.mxu0 %v219
  %258 = vmatpush.bf16.msra.mxu0 %v218
  %259 = vmatpush.bf16.msra.mxu0 %v217
  %260 = vmatpush.bf16.msra.mxu0 %v216
  %261 = vmatmul.bf16.gmra.mxu0 %v107
  %v262 = vpop.f32.mrf.mxu0
  %v263 = vadd.f32 %v250, %v262
  %v264 = vpop.f32.mrf.mxu0
  %265 = vdwg.mxu0
  %v266 = vmax.f32 %v263, 0.0
  %v267 = vpack.c.bf16 %v266, %v266
  %v268 = vld [vmem:[%s5] sm:$0xf]
  %v269 = vld [vmem:[%s5 + $0x4] sm:$0xf]
  %v270 = vld [vmem:[%s5 + $0x8] sm:$0xf]
  %v271 = vld [vmem:[%s5 + $0xc] sm:$0xf]
  %v272 = vld [vmem:[%s5 + $0x10] sm:$0xf]
  %v273 = vld [vmem:[%s5 + $0x14] sm:$0xf]
  %v274 = vld [vmem:[%s5 + $0x18] sm:$0xf]
  %v275 = vld [vmem:[%s5 + $0x1c] sm:$0xf]
  %v276 = vld [vmem:[%s5 + $0x20] sm:$0xf]
  %v277 = vld [vmem:[%s5 + $0x24] sm:$0xf]
  %v278 = vld [vmem:[%s5 + $0x28] sm:$0xf]
  %v279 = vld [vmem:[%s5 + $0x2c] sm:$0xf]
  %v280 = vld [vmem:[%s5 + $0x30] sm:$0x3]
  %v281 = vld [vmem:[%s6] sm:$0x1]
  %v283 = vperm.slane %v281, 0
  %v298 = vunpack.c.l.b16 %v268
  %v299 = vunpack.c.l.b16 %v269
  %v300 = vunpack.c.l.b16 %v270
  %v301 = vunpack.c.l.b16 %v271
  %v302 = vunpack.c.l.b16 %v272
  %v303 = vunpack.c.l.b16 %v273
  %v304 = vunpack.c.l.b16 %v274
  %v305 = vunpack.c.l.b16 %v275
  %v306 = vunpack.c.l.b16 %v276
  %v307 = vunpack.c.l.b16 %v277
  %v308 = vunpack.c.l.b16 %v278
  %v309 = vunpack.c.l.b16 %v279
  %v310 = vunpack.c.l.b16 %v280
  %v311 = vpack.c.b16 %v299, %v298
  %v312 = vpack.c.b16 %v301, %v300
  %v313 = vpack.c.b16 %v303, %v302
  %v314 = vpack.c.b16 %v305, %v304
  %v315 = vpack.c.b16 %v307, %v306
  %v316 = vpack.c.b16 %v309, %v308
  %v317 = vpack.c.b16 %v310, %v310
  %vm324 = vcmask 818176
  %v326 = vsel %vm324, %v267, 0
  %vm328 = vcmask 1041408
  %v330 = vsel %vm328, %v317, 0
  %332 = vmatpush.bf16.msra.mxu0 0
  %333 = vmatpush.bf16.msra.mxu0 %v330
  %334 = vmatpush.bf16.msra.mxu0 %v316
  %335 = vmatpush.bf16.msra.mxu0 %v315
  %336 = vmatpush.bf16.msra.mxu0 %v314
  %337 = vmatpush.bf16.msra.mxu0 %v313
  %338 = vmatpush.bf16.msra.mxu0 %v312
  %339 = vmatpush.bf16.msra.mxu0 %v311
  %340 = vmatmul.bf16.gmra.mxu0 %v326
  %v341 = vpop.f32.mrf.mxu0
  %v342 = vadd.f32 %v283, %v341
  %v343 = vpop.f32.mrf.mxu0
  %344 = vdwg.mxu0
  %v345 = vmax.f32 %v342, 0.0
  %v346 = vpack.c.bf16 %v345, %v345
  %v347 = vld [vmem:[%s7] sm:$0xf]
  %v348 = vld [vmem:[%s7 + $0x4] sm:$0xf]
  %v349 = vld [vmem:[%s7 + $0x8] sm:$0xf]
  %v350 = vld [vmem:[%s7 + $0xc] sm:$0xf]
  %v351 = vld [vmem:[%s7 + $0x10] sm:$0xf]
  %v352 = vld [vmem:[%s7 + $0x14] sm:$0xf]
  %v353 = vld [vmem:[%s7 + $0x18] sm:$0xf]
  %v354 = vld [vmem:[%s7 + $0x1c] sm:$0xf]
  %v355 = vld [vmem:[%s7 + $0x20] sm:$0xf]
  %v356 = vld [vmem:[%s7 + $0x24] sm:$0xf]
  %v357 = vld [vmem:[%s7 + $0x28] sm:$0xf]
  %v358 = vld [vmem:[%s7 + $0x2c] sm:$0xf]
  %v359 = vld [vmem:[%s7 + $0x30] sm:$0x3]
  %v360 = vld [vmem:[%s8] sm:$0x1]
  %v362 = vperm.slane %v360, 0
  %v377 = vunpack.c.l.b16 %v347
  %v378 = vunpack.c.l.b16 %v348
  %v379 = vunpack.c.l.b16 %v349
  %v380 = vunpack.c.l.b16 %v350
  %v381 = vunpack.c.l.b16 %v351
  %v382 = vunpack.c.l.b16 %v352
  %v383 = vunpack.c.l.b16 %v353
  %v384 = vunpack.c.l.b16 %v354
  %v385 = vunpack.c.l.b16 %v355
  %v386 = vunpack.c.l.b16 %v356
  %v387 = vunpack.c.l.b16 %v357
  %v388 = vunpack.c.l.b16 %v358
  %v389 = vunpack.c.l.b16 %v359
  %v390 = vpack.c.b16 %v378, %v377
  %v391 = vpack.c.b16 %v380, %v379
  %v392 = vpack.c.b16 %v382, %v381
  %v393 = vpack.c.b16 %v384, %v383
  %v394 = vpack.c.b16 %v386, %v385
  %v395 = vpack.c.b16 %v388, %v387
  %v396 = vpack.c.b16 %v389, %v389
  %v404 = vsel %vm324, %v346, 0
  %v407 = vsel %vm328, %v396, 0
  %409 = vmatpush.bf16.msra.mxu0 0
  %410 = vmatpush.bf16.msra.mxu0 %v407
  %411 = vmatpush.bf16.msra.mxu0 %v395
  %412 = vmatpush.bf16.msra.mxu0 %v394
  %413 = vmatpush.bf16.msra.mxu0 %v393
  %414 = vmatpush.bf16.msra.mxu0 %v392
  %415 = vmatpush.bf16.msra.mxu0 %v391
  %416 = vmatpush.bf16.msra.mxu0 %v390
  %417 = vmatmul.bf16.gmra.mxu0 %v404
  %v418 = vpop.f32.mrf.mxu0
  %v419 = vadd.f32 %v362, %v418
  %v420 = vpop.f32.mrf.mxu0
  %421 = vdwg.mxu0
  %v422 = vmax.f32 %v419, 0.0
  %v423 = vld [vmem:[%s9] sm:$0x1]
  %v425 = vperm.slane %v423, 0
  %v427 = vmul.f32 %v422, %v425
  %vm428 = vcmask 162816
  %v429 = vsel %vm428, %v427, 0.0
  %430 = vadd.xlane.f32.xlu0 %v429
  %v431 = vpop.xlane.xlu0 %430
  %v432 = vld [vmem:[#allocation2] sm:$0x1]
  %v434 = vperm.slane %v432, 0
  %v436 = vadd.f32 %v431, %v434
  %vm437 = vcmask 7168
  %438 = vst.msk [vmem:[%s11] sm:$0xff] %vm437, %v436
  // Predicated region
  $region46: #{tpu_custom_call.1} parent=0 // pred_check
    _
  $region47: #{tpu_custom_call.1} parent=0 // pred_check_branch
    %440 = sbr.rel (0) target = $region49
  $region48: #{tpu_custom_call.1} parent=0 // pred_region
    _
  $region49: #{tpu_custom_call.1} parent=0 // pred_fallthru
    _
  // Predicated region
  $region50: #{tpu_custom_call.1} parent=0 // pred_check
    _
  $region51: #{tpu_custom_call.1} parent=0 // pred_check_branch
    %442 = sbr.rel (0) target = $region53
  $region52: #{tpu_custom_call.1} parent=0 // pred_region
    _
  $region53: #{tpu_custom_call.1} parent=0 // pred_fallthru
    _

</llo_original>
